<compile_context>
chip_gen: v5e
topology: v5e:2x2
jax: 0.10.0
libtpu: 0.0.40
codegen_flags: <defaults>
</compile_context>

<pallas_src>
import functools

import jax
import jax.numpy as jnp
from jax.experimental import pallas as pl
from jax.experimental.pallas import tpu as pltpu

# ------------------------------ constants (from the spec) ------------------------------
P_MIN = 0.3176
P_MAX = 1270.1545
LOGL_MIN = -1.7647
LOGL_MAX = 8.9979
SIXTH = (-0.00276770417, 0.0545782779, -0.131306184, -4.05827702,
         37.400481, 28.4345651, 51.5162034)
THIRD = (2.5577829, 17.73608751, 48.96952155, 45.55950728)
EPSILON = 1e-8
INV_LN10 = 0.4342944819032518  # 1 / ln(10)

LANES = 128
SUBLANES = 8
MAX_TILE_ROWS = 1024           # (1024,128) f32 tile = 512 KiB / buffer


# ------------------------------------ kernel -------------------------------------------
def pu_kernel(im_ref, out_ref, *, apply_disp, lum_top, lum_bottom):
    x = im_ref[...]

    if apply_disp:  # sdr display model (compile-time branch; 'hdr' skips it)
        xn = x * (1.0 / 255.0)
        # xn ** 2.2 via exp/log on the EUP; exact 0 for non-positive pixels.
        p = jnp.where(xn > 0.0,
                      jnp.exp(2.2 * jnp.log(jnp.maximum(xn, 1e-30))),
                      0.0)
        x = (lum_top - lum_bottom) * p + lum_bottom

    # clamp_image: clamp(log10(clamp(x, eps, inf)), logL_min, logL_max)
    x = jnp.maximum(x, EPSILON)
    logl = jnp.log(x) * INV_LN10
    logl = jnp.clip(logl, LOGL_MIN, LOGL_MAX)

    # apply_pu: piecewise polynomial (Horner form)
    t = THIRD
    third = ((t[0] * logl + t[1]) * logl + t[2]) * logl + t[3]
    s = SIXTH
    sixth = s[0] * logl + s[1]
    for c in s[2:]:
        sixth = sixth * logl + c

    pu = jnp.where(logl >= 0.8, sixth, third)

    # scale to [0, 1]
    out_ref[...] = (pu - P_MIN) * (1.0 / (P_MAX - P_MIN))


# ------------------------------------ wrapper -------------------------------------------
def pu_transform(im, im_type='sdr', lum_top=100.0, lum_bottom=0.5):
    """JAX/Pallas equivalent of PUTransformer.forward(im, im_type, lum_top, lum_bottom)."""
    orig_shape = im.shape
    flat = im.reshape(-1).astype(jnp.float32)
    n = flat.shape[0]

    # lane-dense (rows, 128) slab, rows a multiple of the tile height
    rows = pl.cdiv(n, LANES)
    rows = ((rows + SUBLANES - 1) // SUBLANES) * SUBLANES
    tile_rows = min(MAX_TILE_ROWS, rows)
    rows = ((rows + tile_rows - 1) // tile_rows) * tile_rows
    total = rows * LANES

    padded = jnp.pad(flat, (0, total - n), constant_values=1.0).reshape(rows, LANES)

    kernel = functools.partial(
        pu_kernel,
        apply_disp=(im_type != 'hdr'),
        lum_top=float(lum_top),
        lum_bottom=float(lum_bottom),
    )

    out2d = pl.pallas_call(
        kernel,
        out_shape=jax.ShapeDtypeStruct((rows, LANES), jnp.float32),
        grid_spec=pltpu.PrefetchScalarGridSpec(
            num_scalar_prefetch=0,
            grid=(rows // tile_rows,),
            in_specs=[pl.BlockSpec((tile_rows, LANES), lambda i: (i, 0))],
            out_specs=pl.BlockSpec((tile_rows, LANES), lambda i: (i, 0)),
        ),
        compiler_params=pltpu.CompilerParams(
            dimension_semantics=("parallel",)),
    )(padded)

    return out2d.reshape(-1)[:n].reshape(orig_shape)


# ---------------------------------- reference -------------------------------------------
def ref_forward(im, im_type='sdr', lum_top=100.0, lum_bottom=0.5):
    x = im.astype(jnp.float32)
    if im_type != 'hdr':
        x = (lum_top - lum_bottom) * (x / 255.0) ** 2.2 + lum_bottom
    x = jnp.clip(jnp.log10(jnp.clip(x, EPSILON, None)), LOGL_MIN, LOGL_MAX)
    third = THIRD[0] * x ** 3 + THIRD[1] * x ** 2 + THIRD[2] * x + THIRD[3]
    sixth = (SIXTH[0] * x ** 6 + SIXTH[1] * x ** 5 + SIXTH[2] * x ** 4
             + SIXTH[3] * x ** 3 + SIXTH[4] * x ** 2 + SIXTH[5] * x + SIXTH[6])
    pu = jnp.where(x >= 0.8, sixth, third)
    return (pu - P_MIN) / (P_MAX - P_MIN)


if __name__ == "__main__":
    key = jax.random.PRNGKey(0)

    # small SDR image batch: [batch, channels, H, W] with pixel values in [0, 255]
    im = jax.random.uniform(key, (2, 3, 16, 16), jnp.float32, minval=0.0, maxval=255.0)

    out = pu_transform(im, im_type='sdr', lum_top=100.0, lum_bottom=0.5)
    out = jax.block_until_ready(out)

    ref = ref_forward(im, im_type='sdr', lum_top=100.0, lum_bottom=0.5)
    assert out.shape == im.shape
    assert bool(jnp.all(jnp.isfinite(out)))
    assert jnp.allclose(out, ref, atol=2e-4, rtol=2e-4)

    # also exercise the 'hdr' path (no display model)
    im_hdr = jax.random.uniform(jax.random.PRNGKey(1), (2, 3, 16, 16), jnp.float32,
                                minval=0.01, maxval=500.0)
    out_hdr = jax.block_until_ready(pu_transform(im_hdr, im_type='hdr'))
    assert jnp.allclose(out_hdr, ref_forward(im_hdr, im_type='hdr'), atol=2e-4, rtol=2e-4)

    print("KERNEL_OK")
</pallas_src>

<mosaic_0001>
module attributes {stable_mosaic.version = 11 : i64} {
  func.func @pu_kernel(%arg0: i32, %arg1: memref<16x128xf32, #tpu.memory_space<vmem>>, %arg2: memref<16x128xf32, #tpu.memory_space<vmem>>) attributes {dimension_semantics = [#tpu.dimension_semantics<parallel>], iteration_bounds = array<i64: 1>, scalar_prefetch = 0 : i64, scratch_operands = 0 : i64, tpu.core_type = #tpu.core_type<tc>, window_params = [{transform_indices = @transform_0, window_bounds = array<i64: 16, 128>}, {transform_indices = @transform_1, window_bounds = array<i64: 16, 128>}]} {
    %c0 = arith.constant 0 : index
    %c0_0 = arith.constant 0 : index
    %0 = vector.load %arg1[%c0, %c0_0] : memref<16x128xf32, #tpu.memory_space<vmem>>, vector<16x128xf32>
    %cst = arith.constant 0.00392156886 : f32
    %1 = vector.broadcast %cst : f32 to vector<16x128xf32>
    %2 = arith.mulf %0, %1 : vector<16x128xf32>
    %cst_1 = arith.constant 0.000000e+00 : f32
    %3 = vector.broadcast %cst_1 : f32 to vector<16x128xf32>
    %4 = arith.cmpf ogt, %2, %3 : vector<16x128xf32>
    %cst_2 = arith.constant 1.000000e-30 : f32
    %5 = vector.broadcast %cst_2 : f32 to vector<16x128xf32>
    %6 = arith.maximumf %2, %5 : vector<16x128xf32>
    %7 = math.log %6 : vector<16x128xf32>
    %cst_3 = arith.constant 2.200000e+00 : f32
    %8 = vector.broadcast %cst_3 : f32 to vector<16x128xf32>
    %9 = arith.mulf %8, %7 : vector<16x128xf32>
    %10 = math.exp %9 : vector<16x128xf32>
    %cst_4 = arith.constant 0.000000e+00 : f32
    %11 = vector.broadcast %cst_4 : f32 to vector<16x128xf32>
    %12 = arith.select %4, %10, %11 : vector<16x128xi1>, vector<16x128xf32>
    %cst_5 = arith.constant 9.950000e+01 : f32
    %13 = vector.broadcast %cst_5 : f32 to vector<16x128xf32>
    %14 = arith.mulf %13, %12 : vector<16x128xf32>
    %cst_6 = arith.constant 5.000000e-01 : f32
    %15 = vector.broadcast %cst_6 : f32 to vector<16x128xf32>
    %16 = arith.addf %14, %15 : vector<16x128xf32>
    %cst_7 = arith.constant 9.99999993E-9 : f32
    %17 = vector.broadcast %cst_7 : f32 to vector<16x128xf32>
    %18 = arith.maximumf %16, %17 : vector<16x128xf32>
    %19 = math.log %18 : vector<16x128xf32>
    %cst_8 = arith.constant 0.434294492 : f32
    %20 = vector.broadcast %cst_8 : f32 to vector<16x128xf32>
    %21 = arith.mulf %19, %20 : vector<16x128xf32>
    %cst_9 = arith.constant -1.764700e+00 : f32
    %cst_10 = arith.constant 8.997900e+00 : f32
    %22 = vector.broadcast %cst_9 : f32 to vector<16x128xf32>
    %23 = arith.maximumf %22, %21 : vector<16x128xf32>
    %24 = vector.broadcast %cst_10 : f32 to vector<16x128xf32>
    %25 = arith.minimumf %24, %23 : vector<16x128xf32>
    %cst_11 = arith.constant 2.55778289 : f32
    %26 = vector.broadcast %cst_11 : f32 to vector<16x128xf32>
    %27 = arith.mulf %26, %25 : vector<16x128xf32>
    %cst_12 = arith.constant 17.7360878 : f32
    %28 = vector.broadcast %cst_12 : f32 to vector<16x128xf32>
    %29 = arith.addf %27, %28 : vector<16x128xf32>
    %30 = arith.mulf %29, %25 : vector<16x128xf32>
    %cst_13 = arith.constant 48.9695206 : f32
    %31 = vector.broadcast %cst_13 : f32 to vector<16x128xf32>
    %32 = arith.addf %30, %31 : vector<16x128xf32>
    %33 = arith.mulf %32, %25 : vector<16x128xf32>
    %cst_14 = arith.constant 45.5595055 : f32
    %34 = vector.broadcast %cst_14 : f32 to vector<16x128xf32>
    %35 = arith.addf %33, %34 : vector<16x128xf32>
    %cst_15 = arith.constant -0.00276770419 : f32
    %36 = vector.broadcast %cst_15 : f32 to vector<16x128xf32>
    %37 = arith.mulf %36, %25 : vector<16x128xf32>
    %cst_16 = arith.constant 0.0545782782 : f32
    %38 = vector.broadcast %cst_16 : f32 to vector<16x128xf32>
    %39 = arith.addf %37, %38 : vector<16x128xf32>
    %40 = arith.mulf %39, %25 : vector<16x128xf32>
    %cst_17 = arith.constant -0.131306186 : f32
    %41 = vector.broadcast %cst_17 : f32 to vector<16x128xf32>
    %42 = arith.addf %40, %41 : vector<16x128xf32>
    %43 = arith.mulf %42, %25 : vector<16x128xf32>
    %cst_18 = arith.constant -4.05827713 : f32
    %44 = vector.broadcast %cst_18 : f32 to vector<16x128xf32>
    %45 = arith.addf %43, %44 : vector<16x128xf32>
    %46 = arith.mulf %45, %25 : vector<16x128xf32>
    %cst_19 = arith.constant 37.4004822 : f32
    %47 = vector.broadcast %cst_19 : f32 to vector<16x128xf32>
    %48 = arith.addf %46, %47 : vector<16x128xf32>
    %49 = arith.mulf %48, %25 : vector<16x128xf32>
    %cst_20 = arith.constant 28.4345646 : f32
    %50 = vector.broadcast %cst_20 : f32 to vector<16x128xf32>
    %51 = arith.addf %49, %50 : vector<16x128xf32>
    %52 = arith.mulf %51, %25 : vector<16x128xf32>
    %cst_21 = arith.constant 51.5162048 : f32
    %53 = vector.broadcast %cst_21 : f32 to vector<16x128xf32>
    %54 = arith.addf %52, %53 : vector<16x128xf32>
    %cst_22 = arith.constant 8.000000e-01 : f32
    %55 = vector.broadcast %cst_22 : f32 to vector<16x128xf32>
    %56 = arith.cmpf oge, %25, %55 : vector<16x128xf32>
    %57 = arith.select %56, %54, %35 : vector<16x128xi1>, vector<16x128xf32>
    %cst_23 = arith.constant 3.176000e-01 : f32
    %58 = vector.broadcast %cst_23 : f32 to vector<16x128xf32>
    %59 = arith.subf %57, %58 : vector<16x128xf32>
    %cst_24 = arith.constant 7.87502736E-4 : f32
    %60 = vector.broadcast %cst_24 : f32 to vector<16x128xf32>
    %61 = arith.mulf %59, %60 : vector<16x128xf32>
    %c0_25 = arith.constant 0 : index
    %c0_26 = arith.constant 0 : index
    %62 = vector.load %arg2[%c0_25, %c0_26] : memref<16x128xf32, #tpu.memory_space<vmem>>, vector<16x128xf32>
    tpu.vector_store %arg2[%c0_25, %c0_26], %61 {strides = array<i32>} : memref<16x128xf32, #tpu.memory_space<vmem>>, vector<16x128xf32>,
    return
  }
  func.func @transform_0(%arg0: i32) -> (i32, i32) {
    %c0_i32 = arith.constant 0 : i32
    %c0_i32_0 = arith.constant 0 : i32
    return %arg0, %c0_i32 : i32, i32
  }
  func.func @transform_1(%arg0: i32) -> (i32, i32) {
    %c0_i32 = arith.constant 0 : i32
    %c0_i32_0 = arith.constant 0 : i32
    return %arg0, %c0_i32 : i32, i32
  }
}

</mosaic_0001>

<llo_original>
// kernel: tpu_custom_call.1
$region0: #{tpu_custom_call.1}
  #allocation0 [shape = 'u32[]', space=smem, size = 0x4, offset = 0x4, fixed_abs, tag = 'smem constant byte address 0x4 - core index']
  #allocation1 [shape = 'u32[72,128]{1,0:T(1,128)}', space=vmem, size = 0x9000, scoped, tag = 'internal scratch']
  %s0 = inlined_call_operand.hbm [shape: f32[16,128], index: 0, kind: input, shape index: {}]
  %s1 = inlined_call_operand.hbm [shape: f32[16,128], index: 1, kind: output, shape index: {}]
  %s2 = sld [smem:[#allocation0]]
  $region18: #{tpu_custom_call.1} parent=0
    _
  %s4 = ssub.s32 1, %s2
  %s5 = scalar_select 0, %s4, %s2
  $region1: #{tpu_custom_call.1} parent=0
    #allocation2 [shape = 'u8[8192]{0}', space=vmem, size = 0x2000, scoped, tag = 'input window, operand 0, single buffered']
    #allocation3 [shape = 's32[1]{0}', space=sflag, size = 0x4, scoped, tag = 'scoped memory for tpu_custom_call.1']
    #allocation4 [shape = 's32[1]{0}', space=sflag, size = 0x4, scoped, tag = 'scoped memory for tpu_custom_call.1']
    #allocation5 [shape = 'u8[8192]{0}', space=vmem, size = 0x2000, scoped, tag = 'output window, operand 0, single buffered']
    %6 = vsyncpa [#allocation3], 0
    %7 = vsyncpa [#allocation4], 0
    // Predicated region
    $region2: #{tpu_custom_call.1} parent=1 // pred_check
      _
    $region3: #{tpu_custom_call.1} parent=1 // pred_check_branch
      %9 = sbr.rel (0) target = $region5
    $region4: #{tpu_custom_call.1} parent=1 // pred_region
      %11 = vsyncadd [#allocation3], 0
      %s12 = sshll.u32 %s0, 4
      %s13 = int_to_ptr.hbm [resolvable:$true] %s12
      %s14 = sshll.u32 [#allocation2], 4
      %s15 = int_to_ptr.vmem [resolvable:$true] %s14
      %20 = dma.hbm_to_vmem [thread:$0]  %s13, 256, %s15, [#allocation3], 128, 128, 8
    $region5: #{tpu_custom_call.1} parent=1 // pred_fallthru
      _
    // Predicated region
    $region6: #{tpu_custom_call.1} parent=1 // pred_check
      _
    $region7: #{tpu_custom_call.1} parent=1 // pred_check_branch
      %22 = sbr.rel (0) target = $region9
    $region8: #{tpu_custom_call.1} parent=1 // pred_region
      %24 = dma.done [#allocation3], 256
    $region9: #{tpu_custom_call.1} parent=1 // pred_fallthru
      _
    %v25 = vld [vmem:[#allocation2] sm:$0xff]
    %v26 = vld [vmem:[#allocation2 + $0x8] sm:$0xff]
    %v27 = vmul.f32 %v25, 0.003921569
    %v28 = vmul.f32 %v26, 0.003921569
    %vm29 = vcmp.gt.f32.partialorder %v27, 0.0
    %vm30 = vcmp.gt.f32.partialorder %v28, 0.0
    %v31 = vmax.f32 %v27, 1e-30
    %v32 = vmax.f32 %v28, 1e-30
    %v33 = vlog2.pop %v31
    %v34 = vmul.f32 %v33, 0.6931472
    %v35 = vlog2.pop %v32
    %v36 = vmul.f32 %v35, 0.6931472
    %v37 = vmul.f32 %v34, 2.2
    %v38 = vmul.f32 %v36, 2.2
    %v39 = vmul.f32 %v37, 1.442695
    %v40 = vpow.pop %v39
    %v41 = vmul.f32 %v38, 1.442695
    %v42 = vpow.pop %v41
    %v43 = vsel %vm29, %v40, 0.0
    %v44 = vsel %vm30, %v42, 0.0
    %v45 = vmul.f32 %v43, 99.5
    %v46 = vmul.f32 %v44, 99.5
    %v47 = vadd.f32 %v45, 0.5
    %v48 = vadd.f32 %v46, 0.5
    %v49 = vmax.f32 %v47, 1e-08
    %v50 = vmax.f32 %v48, 1e-08
    %v51 = vlog2.pop %v49
    %v52 = vmul.f32 %v51, 0.6931472
    %v53 = vlog2.pop %v50
    %v54 = vmul.f32 %v53, 0.6931472
    %v55 = vmul.f32 %v52, 0.4342945
    %v56 = vmul.f32 %v54, 0.4342945
    %v57 = vmax.f32 %v55, -1.7647
    %v58 = vmax.f32 %v56, -1.7647
    %v59 = vmin.f32 %v57, 8.9979
    %v60 = vmin.f32 %v58, 8.9979
    %v61 = vmul.f32 %v59, 2.557783
    %v62 = vmul.f32 %v60, 2.557783
    %v63 = vadd.f32 %v61, 17.736088
    %v64 = vadd.f32 %v62, 17.736088
    %v65 = vmul.f32 %v63, %v59
    %v66 = vmul.f32 %v64, %v60
    %v67 = vadd.f32 %v65, 48.96952
    %v68 = vadd.f32 %v66, 48.96952
    %v69 = vmul.f32 %v67, %v59
    %v70 = vmul.f32 %v68, %v60
    %v71 = vadd.f32 %v69, 45.559505
    %v72 = vadd.f32 %v70, 45.559505
    %v73 = vmul.f32 %v59, -0.0027677042
    %v74 = vmul.f32 %v60, -0.0027677042
    %v75 = vadd.f32 %v73, 0.05457828
    %v76 = vadd.f32 %v74, 0.05457828
    %v77 = vmul.f32 %v75, %v59
    %v78 = vmul.f32 %v76, %v60
    %v79 = vadd.f32 %v77, -0.13130619
    %v80 = vadd.f32 %v78, -0.13130619
    %v81 = vmul.f32 %v79, %v59
    %v82 = vmul.f32 %v80, %v60
    %v83 = vadd.f32 %v81, -4.058277
    %v84 = vadd.f32 %v82, -4.058277
    %v85 = vmul.f32 %v83, %v59
    %v86 = vmul.f32 %v84, %v60
    %v87 = vadd.f32 %v85, 37.400482
    %v88 = vadd.f32 %v86, 37.400482
    %v89 = vmul.f32 %v87, %v59
    %v90 = vmul.f32 %v88, %v60
    %v91 = vadd.f32 %v89, 28.434565
    %v92 = vadd.f32 %v90, 28.434565
    %v93 = vmul.f32 %v91, %v59
    %v94 = vmul.f32 %v92, %v60
    %v95 = vadd.f32 %v93, 51.516205
    %v96 = vadd.f32 %v94, 51.516205
    %vm97 = vcmp.ge.f32.partialorder %v59, 0.8
    %vm98 = vcmp.ge.f32.partialorder %v60, 0.8
    %v99 = vsel %vm97, %v95, %v71
    %v100 = vsel %vm98, %v96, %v72
    %v101 = vsub.f32 %v99, 0.3176
    %v102 = vsub.f32 %v100, 0.3176
    %v103 = vmul.f32 %v101, 0.00078750274
    %v104 = vmul.f32 %v102, 0.00078750274
    %105 = vst [vmem:[#allocation5] sm:$0xff] %v103
    %106 = vst [vmem:[#allocation5 + $0x8] sm:$0xff] %v104
    // Predicated region
    $region10: #{tpu_custom_call.1} parent=1 // pred_check
      _
    $region11: #{tpu_custom_call.1} parent=1 // pred_check_branch
      %108 = sbr.rel (0) target = $region13
    $region12: #{tpu_custom_call.1} parent=1 // pred_region
      %110 = vsyncadd [#allocation4], 0
      %s111 = sshll.u32 [#allocation5], 4
      %s112 = int_to_ptr.vmem [resolvable:$true] %s111
      %s113 = sshll.u32 %s1, 4
      %s114 = int_to_ptr.hbm [resolvable:$true] %s113
      %119 = dma.vmem_to_hbm [thread:$0]  %s112, 256, %s114, [#allocation4], 128, 128, 8
    $region13: #{tpu_custom_call.1} parent=1 // pred_fallthru
      _
    // Predicated region
    $region14: #{tpu_custom_call.1} parent=1 // pred_check
      _
    $region15: #{tpu_custom_call.1} parent=1 // pred_check_branch
      %121 = sbr.rel (0) target = $region17
    $region16: #{tpu_custom_call.1} parent=1 // pred_region
      %123 = dma.done [#allocation4], 256
    $region17: #{tpu_custom_call.1} parent=1 // pred_fallthru
      _
    %124 = vsyncpa [#allocation3], 1
    %125 = vsyncpa [#allocation4], 1

</llo_original>
